<compile_context>
chip_gen: v5e
topology: v5e:2x2
jax: 0.10.0
libtpu: 0.0.40
codegen_flags: <defaults>
</compile_context>

<pallas_src>
import jax
import jax.numpy as jnp
from jax.experimental import pallas as pl
from jax.experimental.pallas import tpu as pltpu


def _gate_kernel(scal_ref, low_ref, high_ref, wl_ref, wh_ref, o_ref):
    """One (batch-block, spatial-tile) block of the fused 1x1-conv+sigmoid+gate.

    scal_ref : SMEM (1, 2)            -> [bias, gamma]
    low_ref  : VMEM (nb, C_low,  ts)   low-level features (channels on sublanes)
    high_ref : VMEM (nb, C_high, ts)   high-level features
    wl_ref   : VMEM (C_low,  1)        1x1-conv weight, low-channel part (f32)
    wh_ref   : VMEM (C_high, 1)        1x1-conv weight, high-channel part (f32)
    o_ref    : VMEM (nb, C_low,  ts)   gated output (lane-dense last dim)
    """
    bias = scal_ref[0, 0]
    gamma = scal_ref[0, 1]
    # 1x1 conv over channels == per-pixel dot. Cast is fused into the reduction
    # (no full-tile f32 copy of `low` kept live); accumulation stays f32.
    logits = (
        jnp.sum(wl_ref[...] * low_ref[...].astype(jnp.float32),
                axis=1, keepdims=True)
        + jnp.sum(wh_ref[...] * high_ref[...].astype(jnp.float32),
                  axis=1, keepdims=True)
        + bias
    )                                              # (nb, 1, ts) f32
    gate = jax.nn.sigmoid(logits) * gamma          # (nb, 1, ts) f32
    # Final gating in the native dtype (bf16 VPU on v6e/v7x; f32 everywhere).
    o_ref[...] = gate.astype(o_ref.dtype) * low_ref[...]


@jax.jit
def cross_level_gate(low_f, high_f, weight, bias, gamma):
    """low_f: (B, C_low, H, W), high_f: (B, C_high, H, W) — NCHW like PyTorch.

    weight: (1, C_low + C_high, 1, 1) [or anything reshapable to (C_tot,)],
    bias / gamma: scalar or shape-(1,). Returns (B, C_low, H, W).
    """
    B, C_low, H, W = low_f.shape
    C_high = high_f.shape[1]
    C_tot = C_low + C_high
    HW = H * W

    # NCHW-native: flatten spatial only (free reshape; no transpose / concat).
    low3 = low_f.reshape(B, C_low, HW)
    high3 = high_f.reshape(B, C_high, HW)

    # Split the 1x1-conv weight into low / high halves (f32 math).
    w = weight.reshape(C_tot).astype(jnp.float32)
    w_low = w[:C_low].reshape(C_low, 1)
    w_high = w[C_low:].reshape(C_high, 1)

    # Scalars into SMEM; robust to bias/gamma being 0-d or shape-(1,) arrays.
    b0 = jnp.asarray(bias, dtype=jnp.float32).reshape(-1)[0]
    g0 = jnp.asarray(gamma, dtype=jnp.float32).reshape(-1)[0]
    scal = jnp.stack([b0, g0]).reshape(1, 2)

    # ---- Tile sizing -------------------------------------------------------
    # Per-grid-step HBM byte target (~2 MiB): amortizes ~0.35 us/step overhead
    # at v7x's ~3.2 TB/s; larger-than-needed but harmless on v6e/v5e.
    itemsize = jnp.dtype(low_f.dtype).itemsize
    bytes_per_col = (2 * C_low + C_high) * itemsize       # in(low+high) + out(low)
    step_bytes_target = 2 * 1024 * 1024
    # Double-buffered VMEM budget sized to fit v7x's 64 MiB physical VMEM.
    vmem_budget = 36 * 1024 * 1024
    max_cols_vmem = max(128, vmem_budget // (2 * max(1, bytes_per_col)))
    target_cols = max(128, step_bytes_target // max(1, bytes_per_col))

    hw_floor_128 = (HW // 128) * 128
    if hw_floor_128 >= 128:
        # Lane-dense 128-multiple tile; last spatial block may be partial
        # (masked by Pallas — garbage lanes never cross into valid outputs).
        ts = min(target_cols, max_cols_vmem, hw_floor_128)
        ts = max(128, (ts // 128) * 128)
    else:
        # Tiny spatial extent (< 128): full-extent block (equals array dim).
        ts = HW
    n_s = pl.cdiv(HW, ts)

    # Small feature maps: pack several batches per step to hit the byte target.
    if n_s == 1:
        bytes_per_batch_step = max(1, ts * bytes_per_col)
        nb = max(1, min(B, step_bytes_target // bytes_per_batch_step))
        nb = max(1, min(nb, vmem_budget // (2 * bytes_per_batch_step)))
    else:
        nb = 1
    grid = (pl.cdiv(B, nb), n_s)

    out3 = pl.pallas_call(
        _gate_kernel,
        out_shape=jax.ShapeDtypeStruct((B, C_low, HW), low_f.dtype),
        grid=grid,
        in_specs=[
            pl.BlockSpec((1, 2), lambda b, s: (0, 0), memory_space=pltpu.SMEM),
            pl.BlockSpec((nb, C_low, ts), lambda b, s: (b, 0, s)),
            pl.BlockSpec((nb, C_high, ts), lambda b, s: (b, 0, s)),
            pl.BlockSpec((C_low, 1), lambda b, s: (0, 0)),
            pl.BlockSpec((C_high, 1), lambda b, s: (0, 0)),
        ],
        out_specs=pl.BlockSpec((nb, C_low, ts), lambda b, s: (b, 0, s)),
        compiler_params=pltpu.CompilerParams(
            dimension_semantics=("parallel", "parallel"),
            vmem_limit_bytes=48 * 1024 * 1024,
        ),
    )(scal, low3, high3, w_low, w_high)

    return out3.reshape(B, C_low, H, W)


def _reference(low_f, high_f, weight, bias, gamma):
    """Pure-JAX reference mirroring the PyTorch forward (for sanity check)."""
    x = jnp.concatenate([low_f, high_f], axis=1)          # (B, C, H, W)
    w = weight.reshape(-1)                                # (C,)
    logits = jnp.einsum("bchw,c->bhw", x, w) + jnp.asarray(bias).reshape(-1)[0]
    g = jax.nn.sigmoid(logits)[:, None, :, :] * jnp.asarray(gamma).reshape(-1)[0]
    return g * low_f


if __name__ == "__main__":
    key = jax.random.PRNGKey(0)
    k1, k2, k3, _ = jax.random.split(key, 4)

    B, C_low, C_high, H, W = 2, 4, 4, 16, 16
    in_chs = C_low + C_high

    low_f = jax.random.normal(k1, (B, C_low, H, W), dtype=jnp.float32)
    high_f = jax.random.normal(k2, (B, C_high, H, W), dtype=jnp.float32)

    # Deterministic synthetic parameters (Conv2d(in_chs, 1, 1) + gamma).
    conv_w = 0.1 * jax.random.normal(k3, (1, in_chs, 1, 1), dtype=jnp.float32)
    conv_b = jnp.ones((1,), dtype=jnp.float32) * 0.05     # PyTorch-style (1,) params
    gamma = jnp.ones((1,), dtype=jnp.float32)             # nn.Parameter(torch.ones(1))

    out = cross_level_gate(low_f, high_f, conv_w, conv_b, gamma)
    out = jax.block_until_ready(out)

    ref = _reference(low_f, high_f, conv_w, conv_b, gamma)
    assert out.shape == (B, C_low, H, W)
    assert jnp.allclose(out, ref, atol=1e-5, rtol=1e-5)

    print("KERNEL_OK")
</pallas_src>

<mosaic_0001>
module attributes {stable_mosaic.version = 11 : i64} {
  func.func @_gate_kernel(%arg0: i32, %arg1: i32, %arg2: memref<1x2xf32, #tpu.memory_space<smem>>, %arg3: memref<2x4x256xf32, #tpu.memory_space<vmem>>, %arg4: memref<2x4x256xf32, #tpu.memory_space<vmem>>, %arg5: memref<4x1xf32, #tpu.memory_space<vmem>>, %arg6: memref<4x1xf32, #tpu.memory_space<vmem>>, %arg7: memref<2x4x256xf32, #tpu.memory_space<vmem>>) attributes {dimension_semantics = [#tpu.dimension_semantics<parallel>, #tpu.dimension_semantics<parallel>], iteration_bounds = array<i64: 1, 1>, scalar_prefetch = 0 : i64, scratch_operands = 0 : i64, tpu.core_type = #tpu.core_type<tc>, window_params = [{transform_indices = @transform_0, window_bounds = array<i64: 1, 2>}, {transform_indices = @transform_1, window_bounds = array<i64: 2, 4, 256>}, {transform_indices = @transform_2, window_bounds = array<i64: 2, 4, 256>}, {pipeline_mode = #tpu.pipeline_mode<synchronous>, transform_indices = @transform_3, window_bounds = array<i64: 4, 1>}, {pipeline_mode = #tpu.pipeline_mode<synchronous>, transform_indices = @transform_4, window_bounds = array<i64: 4, 1>}, {transform_indices = @transform_5, window_bounds = array<i64: 2, 4, 256>}]} {
    %c0 = arith.constant 0 : index
    %c0_0 = arith.constant 0 : index
    %0 = memref.load %arg2[%c0, %c0_0] : memref<1x2xf32, #tpu.memory_space<smem>>
    %c0_1 = arith.constant 0 : index
    %c1 = arith.constant 1 : index
    %1 = memref.load %arg2[%c0_1, %c1] : memref<1x2xf32, #tpu.memory_space<smem>>
    %c0_2 = arith.constant 0 : index
    %c0_3 = arith.constant 0 : index
    %2 = vector.load %arg5[%c0_2, %c0_3] : memref<4x1xf32, #tpu.memory_space<vmem>>, vector<4x1xf32>
    %c0_4 = arith.constant 0 : index
    %c0_5 = arith.constant 0 : index
    %c0_6 = arith.constant 0 : index
    %3 = vector.load %arg3[%c0_4, %c0_5, %c0_6] : memref<2x4x256xf32, #tpu.memory_space<vmem>>, vector<2x4x256xf32>
    %4 = vector.shape_cast %2 : vector<4x1xf32> to vector<1x4x1xf32>
    %5 = vector.broadcast %4 : vector<1x4x1xf32> to vector<2x4x256xf32>
    %6 = arith.mulf %5, %3 : vector<2x4x256xf32>
    %cst = arith.constant dense<0.000000e+00> : vector<2x256xf32>
    %7 = vector.multi_reduction <add>, %6, %cst [1] : vector<2x4x256xf32> to vector<2x256xf32>
    %8 = vector.shape_cast %7 : vector<2x256xf32> to vector<2x1x256xf32>
    %c0_7 = arith.constant 0 : index
    %c0_8 = arith.constant 0 : index
    %9 = vector.load %arg6[%c0_7, %c0_8] : memref<4x1xf32, #tpu.memory_space<vmem>>, vector<4x1xf32>
    %c0_9 = arith.constant 0 : index
    %c0_10 = arith.constant 0 : index
    %c0_11 = arith.constant 0 : index
    %10 = vector.load %arg4[%c0_9, %c0_10, %c0_11] : memref<2x4x256xf32, #tpu.memory_space<vmem>>, vector<2x4x256xf32>
    %11 = vector.shape_cast %9 : vector<4x1xf32> to vector<1x4x1xf32>
    %12 = vector.broadcast %11 : vector<1x4x1xf32> to vector<2x4x256xf32>
    %13 = arith.mulf %12, %10 : vector<2x4x256xf32>
    %cst_12 = arith.constant dense<0.000000e+00> : vector<2x256xf32>
    %14 = vector.multi_reduction <add>, %13, %cst_12 [1] : vector<2x4x256xf32> to vector<2x256xf32>
    %15 = vector.shape_cast %14 : vector<2x256xf32> to vector<2x1x256xf32>
    %16 = arith.addf %8, %15 : vector<2x1x256xf32>
    %17 = vector.broadcast %0 : f32 to vector<2x1x256xf32>
    %18 = arith.addf %16, %17 : vector<2x1x256xf32>
    %19 = arith.negf %18 : vector<2x1x256xf32>
    %20 = math.exp %19 : vector<2x1x256xf32>
    %cst_13 = arith.constant 1.000000e+00 : f32
    %21 = vector.broadcast %cst_13 : f32 to vector<2x1x256xf32>
    %22 = arith.addf %21, %20 : vector<2x1x256xf32>
    %23 = arith.divf %21, %22 : vector<2x1x256xf32>
    %24 = vector.broadcast %1 : f32 to vector<2x1x256xf32>
    %25 = arith.mulf %23, %24 : vector<2x1x256xf32>
    %c0_14 = arith.constant 0 : index
    %c0_15 = arith.constant 0 : index
    %c0_16 = arith.constant 0 : index
    %26 = vector.load %arg3[%c0_14, %c0_15, %c0_16] : memref<2x4x256xf32, #tpu.memory_space<vmem>>, vector<2x4x256xf32>
    %27 = vector.broadcast %25 : vector<2x1x256xf32> to vector<2x4x256xf32>
    %28 = arith.mulf %27, %26 : vector<2x4x256xf32>
    %c0_17 = arith.constant 0 : index
    %c0_18 = arith.constant 0 : index
    %c0_19 = arith.constant 0 : index
    %29 = vector.load %arg7[%c0_17, %c0_18, %c0_19] : memref<2x4x256xf32, #tpu.memory_space<vmem>>, vector<2x4x256xf32>
    tpu.vector_store %arg7[%c0_17, %c0_18, %c0_19], %28 {strides = array<i32>} : memref<2x4x256xf32, #tpu.memory_space<vmem>>, vector<2x4x256xf32>,
    return
  }
  func.func @transform_0(%arg0: i32, %arg1: i32) -> (i32, i32) {
    %c0_i32 = arith.constant 0 : i32
    %c0_i32_0 = arith.constant 0 : i32
    %c0_i32_1 = arith.constant 0 : i32
    return %c0_i32, %c0_i32_0 : i32, i32
  }
  func.func @transform_1(%arg0: i32, %arg1: i32) -> (i32, i32, i32) {
    %c0_i32 = arith.constant 0 : i32
    %c0_i32_0 = arith.constant 0 : i32
    return %arg0, %c0_i32, %arg1 : i32, i32, i32
  }
  func.func @transform_2(%arg0: i32, %arg1: i32) -> (i32, i32, i32) {
    %c0_i32 = arith.constant 0 : i32
    %c0_i32_0 = arith.constant 0 : i32
    return %arg0, %c0_i32, %arg1 : i32, i32, i32
  }
  func.func @transform_3(%arg0: i32, %arg1: i32) -> (i32, i32) {
    %c0_i32 = arith.constant 0 : i32
    %c0_i32_0 = arith.constant 0 : i32
    %c0_i32_1 = arith.constant 0 : i32
    return %c0_i32, %c0_i32_0 : i32, i32
  }
  func.func @transform_4(%arg0: i32, %arg1: i32) -> (i32, i32) {
    %c0_i32 = arith.constant 0 : i32
    %c0_i32_0 = arith.constant 0 : i32
    %c0_i32_1 = arith.constant 0 : i32
    return %c0_i32, %c0_i32_0 : i32, i32
  }
  func.func @transform_5(%arg0: i32, %arg1: i32) -> (i32, i32, i32) {
    %c0_i32 = arith.constant 0 : i32
    %c0_i32_0 = arith.constant 0 : i32
    return %arg0, %c0_i32, %arg1 : i32, i32, i32
  }
}

</mosaic_0001>

<llo_original>
// kernel: cross_level_gate.1
$region0: #{cross_level_gate.1}
  #allocation0 [shape = 'u32[]', space=smem, size = 0x4, offset = 0x4, fixed_abs, tag = 'smem constant byte address 0x4 - core index']
  #allocation1 [shape = 'u32[72,128]{1,0:T(1,128)}', space=vmem, size = 0x9000, scoped, tag = 'internal scratch']
  %s0 = inlined_call_operand.vmem [shape: f32[1,2], index: 0, kind: input, shape index: {}]
  %s1 = inlined_call_operand.vmem [shape: f32[2,4,256], index: 1, kind: input, shape index: {}]
  %s2 = inlined_call_operand.vmem [shape: f32[2,4,256], index: 2, kind: input, shape index: {}]
  %s3 = inlined_call_operand.vmem [shape: f32[4,1], index: 3, kind: input, shape index: {}]
  %s4 = inlined_call_operand.vmem [shape: f32[4,1], index: 4, kind: input, shape index: {}]
  %s5 = inlined_call_operand.vmem [shape: f32[2,4,256], index: 5, kind: output, shape index: {}]
  %s6 = sld [smem:[#allocation0]]
  $region34: #{cross_level_gate.1} parent=0
    _
  %s8 = ssub.s32 1, %s6
  %s9 = scalar_select 0, %s8, %s6
  $region1: #{cross_level_gate.1} parent=0
    #allocation2 [shape = 'u8[512]{0}', space=smem, size = 0x200, scoped, tag = 'input window, operand 0, single buffered']
    #allocation3 [shape = 's32[1]{0}', space=sflag, size = 0x4, scoped, tag = 'scoped memory for cross_level_gate.1']
    %10 = vsyncpa [#allocation3], 0
    // Predicated region
    $region2: #{cross_level_gate.1} parent=1 // pred_check
      _
    $region3: #{cross_level_gate.1} parent=1 // pred_check_branch
      %12 = sbr.rel (0) target = $region5
    $region4: #{cross_level_gate.1} parent=1 // pred_region
      %14 = vsyncadd [#allocation3], 0
      %s16 = sshll.u32 %s0, 4
      %s17 = int_to_ptr.vmem [resolvable:$true] %s16
      %19 = dma.vmem_to_smem %s17, 16, [#allocation2], [#allocation3]
    $region5: #{cross_level_gate.1} parent=1 // pred_fallthru
      _
    // Predicated region
    $region6: #{cross_level_gate.1} parent=1 // pred_check
      _
    $region7: #{cross_level_gate.1} parent=1 // pred_check_branch
      %21 = sbr.rel (0) target = $region9
    $region8: #{cross_level_gate.1} parent=1 // pred_region
      _
    $region9: #{cross_level_gate.1} parent=1 // pred_fallthru
      _
    // Predicated region
    $region10: #{cross_level_gate.1} parent=1 // pred_check
      _
    $region11: #{cross_level_gate.1} parent=1 // pred_check_branch
      %23 = sbr.rel (0) target = $region13
    $region12: #{cross_level_gate.1} parent=1 // pred_region
      _
    $region13: #{cross_level_gate.1} parent=1 // pred_fallthru
      _
    // Predicated region
    $region14: #{cross_level_gate.1} parent=1 // pred_check
      _
    $region15: #{cross_level_gate.1} parent=1 // pred_check_branch
      %25 = sbr.rel (0) target = $region17
    $region16: #{cross_level_gate.1} parent=1 // pred_region
      _
    $region17: #{cross_level_gate.1} parent=1 // pred_fallthru
      _
    // Predicated region
    $region18: #{cross_level_gate.1} parent=1 // pred_check
      _
    $region19: #{cross_level_gate.1} parent=1 // pred_check_branch
      %27 = sbr.rel (0) target = $region21
    $region20: #{cross_level_gate.1} parent=1 // pred_region
      _
    $region21: #{cross_level_gate.1} parent=1 // pred_fallthru
      _
    // Predicated region
    $region22: #{cross_level_gate.1} parent=1 // pred_check
      _
    $region23: #{cross_level_gate.1} parent=1 // pred_check_branch
      %29 = sbr.rel (0) target = $region25
    $region24: #{cross_level_gate.1} parent=1 // pred_region
      %31 = dma.done [#allocation3], 16
    $region25: #{cross_level_gate.1} parent=1 // pred_fallthru
      _
    %32 = sfence
    %s33 = sld [smem:[#allocation2]]
    %s34 = sld [smem:[#allocation2 + $0x1]]
    %v35 = vld [vmem:[%s3] sm:$0xf]
    %v36 = vld [vmem:[%s1] sm:$0xff]
    %v37 = vld [vmem:[%s1 + $0x8] sm:$0xff]
    %39 = vset.pattern.permute.xlu0 0
    %40 = vperm.xlu0 %39, %v35
    %v41 = vpop.permute.xlu0 %40
    %45 = vst [vmem:[#allocation1] ss:$2 sm:$0xff] %v36
    %v46 = vld.sshfl [vmem:[#allocation1] sm:$0xff pattern:$0x75316420]
    %v47 = vld.sshfl [vmem:[#allocation1 + $0x8] sm:$0xff pattern:$0x75316420]
    %s48 = scalar_lea.vmem [#allocation1], 16
    %49 = vst [vmem:[%s48] ss:$2 sm:$0xff] %v37
    %v50 = vld.sshfl [vmem:[#allocation1 + $0x10] sm:$0xff pattern:$0x75316420]
    %v51 = vld.sshfl [vmem:[#allocation1 + $0x18] sm:$0xff pattern:$0x75316420]
    %v56 = vmul.f32 %v41, %v46
    %v57 = vmul.f32 %v41, %v47
    %v58 = vmul.f32 %v41, %v50
    %v59 = vmul.f32 %v41, %v51
    %vm60 = vcmask 1043456
    %v61 = vsel %vm60, %v56, 0.0
    %v62 = vrot.slane %v61, 4
    %v63 = vadd.f32 %v61, %v62
    %v64 = vrot.slane %v63, 2
    %v65 = vadd.f32 %v63, %v64
    %v66 = vrot.slane %v65, 1
    %v67 = vadd.f32 %v65, %v66
    %v68 = vsel %vm60, %v57, 0.0
    %v69 = vrot.slane %v68, 4
    %v70 = vadd.f32 %v68, %v69
    %v71 = vrot.slane %v70, 2
    %v72 = vadd.f32 %v70, %v71
    %v73 = vrot.slane %v72, 1
    %v74 = vadd.f32 %v72, %v73
    %v75 = vsel %vm60, %v58, 0.0
    %v76 = vrot.slane %v75, 4
    %v77 = vadd.f32 %v75, %v76
    %v78 = vrot.slane %v77, 2
    %v79 = vadd.f32 %v77, %v78
    %v80 = vrot.slane %v79, 1
    %v81 = vadd.f32 %v79, %v80
    %v82 = vsel %vm60, %v59, 0.0
    %v83 = vrot.slane %v82, 4
    %v84 = vadd.f32 %v82, %v83
    %v85 = vrot.slane %v84, 2
    %v86 = vadd.f32 %v84, %v85
    %v87 = vrot.slane %v86, 1
    %v88 = vadd.f32 %v86, %v87
    %v89 = vld [vmem:[%s4] sm:$0xf]
    %v90 = vld [vmem:[%s2] sm:$0xff]
    %v91 = vld [vmem:[%s2 + $0x8] sm:$0xff]
    %93 = vset.pattern.permute.xlu0 0
    %94 = vperm.xlu0 %93, %v89
    %v95 = vpop.permute.xlu0 %94
    %99 = vst [vmem:[#allocation1] ss:$2 sm:$0xff] %v90
    %v100 = vld.sshfl [vmem:[#allocation1] sm:$0xff pattern:$0x75316420]
    %v101 = vld.sshfl [vmem:[#allocation1 + $0x8] sm:$0xff pattern:$0x75316420]
    %s102 = scalar_lea.vmem [#allocation1], 16
    %103 = vst [vmem:[%s102] ss:$2 sm:$0xff] %v91
    %v104 = vld.sshfl [vmem:[#allocation1 + $0x10] sm:$0xff pattern:$0x75316420]
    %v105 = vld.sshfl [vmem:[#allocation1 + $0x18] sm:$0xff pattern:$0x75316420]
    %v110 = vmul.f32 %v95, %v100
    %v111 = vmul.f32 %v95, %v101
    %v112 = vmul.f32 %v95, %v104
    %v113 = vmul.f32 %v95, %v105
    %v114 = vsel %vm60, %v110, 0.0
    %v115 = vrot.slane %v114, 4
    %v116 = vadd.f32 %v114, %v115
    %v117 = vrot.slane %v116, 2
    %v118 = vadd.f32 %v116, %v117
    %v119 = vrot.slane %v118, 1
    %v120 = vadd.f32 %v118, %v119
    %v121 = vsel %vm60, %v111, 0.0
    %v122 = vrot.slane %v121, 4
    %v123 = vadd.f32 %v121, %v122
    %v124 = vrot.slane %v123, 2
    %v125 = vadd.f32 %v123, %v124
    %v126 = vrot.slane %v125, 1
    %v127 = vadd.f32 %v125, %v126
    %v128 = vsel %vm60, %v112, 0.0
    %v129 = vrot.slane %v128, 4
    %v130 = vadd.f32 %v128, %v129
    %v131 = vrot.slane %v130, 2
    %v132 = vadd.f32 %v130, %v131
    %v133 = vrot.slane %v132, 1
    %v134 = vadd.f32 %v132, %v133
    %v135 = vsel %vm60, %v113, 0.0
    %v136 = vrot.slane %v135, 4
    %v137 = vadd.f32 %v135, %v136
    %v138 = vrot.slane %v137, 2
    %v139 = vadd.f32 %v137, %v138
    %v140 = vrot.slane %v139, 1
    %v141 = vadd.f32 %v139, %v140
    %v142 = vadd.f32 %v67, %v120
    %v143 = vadd.f32 %v74, %v127
    %v144 = vadd.f32 %v81, %v134
    %v145 = vadd.f32 %v88, %v141
    %v146 = vstv %s33
    %v147 = vadd.f32 %v142, %v146
    %v148 = vadd.f32 %v143, %v146
    %v149 = vadd.f32 %v144, %v146
    %v150 = vadd.f32 %v145, %v146
    %v151 = vxor.u32 %v147, 2147483648
    %v152 = vxor.u32 %v148, 2147483648
    %v153 = vxor.u32 %v149, 2147483648
    %v154 = vxor.u32 %v150, 2147483648
    %v155 = vmul.f32 %v151, 1.442695
    %v156 = vpow.pop %v155
    %v157 = vmul.f32 %v152, 1.442695
    %v158 = vpow.pop %v157
    %v159 = vmul.f32 %v153, 1.442695
    %v160 = vpow.pop %v159
    %v161 = vmul.f32 %v154, 1.442695
    %v162 = vpow.pop %v161
    %v163 = vadd.f32 %v156, 1.0
    %v164 = vadd.f32 %v158, 1.0
    %v165 = vadd.f32 %v160, 1.0
    %v166 = vadd.f32 %v162, 1.0
    %v167 = vrcp.pop %v163
    %v168 = vmul.f32 %v163, %v167
    %v169 = vsub.f32 1.0, %v168
    %v170 = vmul.f32 %v167, %v169
    %v171 = vadd.f32 %v167, %v170
    %vm172 = vweird.f32 %v163
    %vm173 = vweird.f32 %v167
    %vm174 = vmor %vm172, %vm173
    %v175 = vsel %vm174, %v167, %v171
    %v176 = vand.u32 2147483647, %v163
    %vm177 = vcmp.eq.f32.partialorder %v176, 8.507059e+37
    %v178 = vand.u32 %v163, 2147483648
    %v179 = vor.u32 1.1754944e-38, %v178
    %v180 = vsel %vm177, %v179, %v175
    %v181 = vmul.f32 1.0, %v180
    %v182 = vrcp.pop %v164
    %v183 = vmul.f32 %v164, %v182
    %v184 = vsub.f32 1.0, %v183
    %v185 = vmul.f32 %v182, %v184
    %v186 = vadd.f32 %v182, %v185
    %vm187 = vweird.f32 %v164
    %vm188 = vweird.f32 %v182
    %vm189 = vmor %vm187, %vm188
    %v190 = vsel %vm189, %v182, %v186
    %v191 = vand.u32 2147483647, %v164
    %vm192 = vcmp.eq.f32.partialorder %v191, 8.507059e+37
    %v193 = vand.u32 %v164, 2147483648
    %v194 = vor.u32 1.1754944e-38, %v193
    %v195 = vsel %vm192, %v194, %v190
    %v196 = vmul.f32 1.0, %v195
    %v197 = vrcp.pop %v165
    %v198 = vmul.f32 %v165, %v197
    %v199 = vsub.f32 1.0, %v198
    %v200 = vmul.f32 %v197, %v199
    %v201 = vadd.f32 %v197, %v200
    %vm202 = vweird.f32 %v165
    %vm203 = vweird.f32 %v197
    %vm204 = vmor %vm202, %vm203
    %v205 = vsel %vm204, %v197, %v201
    %v206 = vand.u32 2147483647, %v165
    %vm207 = vcmp.eq.f32.partialorder %v206, 8.507059e+37
    %v208 = vand.u32 %v165, 2147483648
    %v209 = vor.u32 1.1754944e-38, %v208
    %v210 = vsel %vm207, %v209, %v205
    %v211 = vmul.f32 1.0, %v210
    %v212 = vrcp.pop %v166
    %v213 = vmul.f32 %v166, %v212
    %v214 = vsub.f32 1.0, %v213
    %v215 = vmul.f32 %v212, %v214
    %v216 = vadd.f32 %v212, %v215
    %vm217 = vweird.f32 %v166
    %vm218 = vweird.f32 %v212
    %vm219 = vmor %vm217, %vm218
    %v220 = vsel %vm219, %v212, %v216
    %v221 = vand.u32 2147483647, %v166
    %vm222 = vcmp.eq.f32.partialorder %v221, 8.507059e+37
    %v223 = vand.u32 %v166, 2147483648
    %v224 = vor.u32 1.1754944e-38, %v223
    %v225 = vsel %vm222, %v224, %v220
    %v226 = vmul.f32 1.0, %v225
    %v227 = vstv %s34
    %v228 = vmul.f32 %v181, %v227
    %v229 = vmul.f32 %v196, %v227
    %v230 = vmul.f32 %v211, %v227
    %v231 = vmul.f32 %v226, %v227
    %232 = vst [vmem:[#allocation1] ss:$2 sm:$0xff] %v36
    %v233 = vld.sshfl [vmem:[#allocation1] sm:$0xff pattern:$0x75316420]
    %v234 = vld.sshfl [vmem:[#allocation1 + $0x8] sm:$0xff pattern:$0x75316420]
    %s235 = scalar_lea.vmem [#allocation1], 16
    %236 = vst [vmem:[%s235] ss:$2 sm:$0xff] %v37
    %v237 = vld.sshfl [vmem:[#allocation1 + $0x10] sm:$0xff pattern:$0x75316420]
    %v238 = vld.sshfl [vmem:[#allocation1 + $0x18] sm:$0xff pattern:$0x75316420]
    %v243 = vmul.f32 %v228, %v233
    %v244 = vmul.f32 %v229, %v234
    %v245 = vmul.f32 %v230, %v237
    %v246 = vmul.f32 %v231, %v238
    %v251 = vrot.slane %v244, 4
    %v252 = vrot.slane %v246, 4
    %v253 = vsel %vm60, %v243, %v251
    %v254 = vsel %vm60, %v245, %v252
    %257 = vst [vmem:[%s5] sm:$0xff] %v253
    %258 = vst [vmem:[%s5 + $0x8] sm:$0xff] %v254
    // Predicated region
    $region26: #{cross_level_gate.1} parent=1 // pred_check
      _
    $region27: #{cross_level_gate.1} parent=1 // pred_check_branch
      %260 = sbr.rel (0) target = $region29
    $region28: #{cross_level_gate.1} parent=1 // pred_region
      _
    $region29: #{cross_level_gate.1} parent=1 // pred_fallthru
      _
    // Predicated region
    $region30: #{cross_level_gate.1} parent=1 // pred_check
      _
    $region31: #{cross_level_gate.1} parent=1 // pred_check_branch
      %262 = sbr.rel (0) target = $region33
    $region32: #{cross_level_gate.1} parent=1 // pred_region
      _
    $region33: #{cross_level_gate.1} parent=1 // pred_fallthru
      _
    %263 = vsyncpa [#allocation3], 1

</llo_original>
